<compile_context>
chip_gen: v7x
topology: tpu7x:2x2x1
jax: 0.10.0
libtpu: 0.0.40
codegen_flags: <defaults>
</compile_context>

<pallas_src>
import functools

import jax
import jax.numpy as jnp
from jax.experimental import pallas as pl
from jax.experimental.pallas import tpu as pltpu


def _fused_kernel(x_ref, w_ref, out_ref, *, input_dim, w1_rows):
    x = x_ref[...]                                  # (TB, input_dim) f32
    o = w1_rows                                     # start of the 128-row sections
    bias = w_ref[o + 512:o + 520, :]                # (8, 128): rows 0..4 hold the 5 biases

    def layer(h, w, b_row, relu=True):
        y = jnp.dot(h, w, preferred_element_type=jnp.float32) + b_row
        return jnp.maximum(y, 0.0) if relu else y

    # Fused branch layer 1: blockdiag(pw1, dw1) -> [patient_h1 | drug_h1] in cols 0:64.
    h = layer(x, w_ref[0:input_dim, :], bias[0:1, :])
    # Fused branch layer 2: blockdiag(pw2, dw2) -> cat([p, d]) in cols 0:32.
    h = layer(h, w_ref[o:o + 128, :], bias[1:2, :])
    # Combined Linear(32,64)+ReLU; Dropout(0.2) = identity (inference mode).
    h = layer(h, w_ref[o + 128:o + 256, :], bias[2:3, :])
    # Combined Linear(64,32)+ReLU.
    h = layer(h, w_ref[o + 256:o + 384, :], bias[3:4, :])
    # Fused heads [rw | clw] -> cols 0:4 regression, cols 4:4+C class logits.
    out_ref[...] = layer(h, w_ref[o + 384:o + 512, :], bias[4:5, :], relu=False)


def init_params(key, input_dim, num_classes=3, dtype=jnp.float32):
    """Deterministic synthetic parameters matching the PyTorch module shapes.

    Linear weights are stored transposed vs PyTorch, i.e. (in, out); biases (1, out).
    """
    drug_dim = input_dim - 4
    shapes = {
        "pw1": (4, 32), "pb1": (1, 32), "pw2": (32, 16), "pb2": (1, 16),
        "dw1": (drug_dim, 32), "db1": (1, 32), "dw2": (32, 16), "db2": (1, 16),
        "cw1": (32, 64), "cb1": (1, 64), "cw2": (64, 32), "cb2": (1, 32),
        "rw": (32, 4), "rb": (1, 4),
        "clw": (32, num_classes), "clb": (1, num_classes),
    }
    params = {}
    keys = jax.random.split(key, len(shapes))
    for k_rng, (name, shape) in zip(keys, shapes.items()):
        params[name] = (0.1 * jax.random.normal(k_rng, shape)).astype(dtype)
    return params


def pack_params(params, input_dim, num_classes=3):
    """Pack all weights/biases into one (w1_rows + 520, 128) f32 slab.

    Layout (row ranges):
      [0, w1_rows)            blockdiag(pw1, dw1)  zero-padded   (real: input_dim x 64)
      [o, o+128)              blockdiag(pw2, dw2)  zero-padded   (real: 64 x 32)
      [o+128, o+256)          cw1                  zero-padded   (real: 32 x 64)
      [o+256, o+384)          cw2                  zero-padded   (real: 64 x 32)
      [o+384, o+512)          [rw | clw]           zero-padded   (real: 32 x (4+C))
      [o+512, o+520)          biases: b1, b2, cb1, cb2, head_b (one row each)
    where o = w1_rows = round_up(input_dim, 8).
    """
    assert input_dim <= 128, "pack_params assumes input_dim <= 128"
    w1_rows = max(8, ((input_dim + 7) // 8) * 8)

    def pad(w, rows):
        out = jnp.zeros((rows, 128), jnp.float32)
        return out.at[: w.shape[0], : w.shape[1]].set(w.astype(jnp.float32))

    # Block-diagonal fusion of the two branches.
    w1 = jnp.zeros((input_dim, 64), jnp.float32)
    w1 = w1.at[:4, :32].set(params["pw1"])
    w1 = w1.at[4:, 32:].set(params["dw1"])
    b1 = jnp.concatenate([params["pb1"], params["db1"]], axis=1)      # (1, 64)

    w2 = jnp.zeros((64, 32), jnp.float32)
    w2 = w2.at[:32, :16].set(params["pw2"])
    w2 = w2.at[32:, 16:].set(params["dw2"])
    b2 = jnp.concatenate([params["pb2"], params["db2"]], axis=1)      # (1, 32)

    # Fused output heads.
    head_w = jnp.concatenate([params["rw"], params["clw"]], axis=1)   # (32, 4+C)
    head_b = jnp.concatenate([params["rb"], params["clb"]], axis=1)   # (1, 4+C)

    bias_block = jnp.zeros((8, 128), jnp.float32)
    bias_block = bias_block.at[0, :64].set(b1[0])
    bias_block = bias_block.at[1, :32].set(b2[0])
    bias_block = bias_block.at[2, :64].set(params["cb1"][0])
    bias_block = bias_block.at[3, :32].set(params["cb2"][0])
    bias_block = bias_block.at[4, : 4 + num_classes].set(head_b[0])

    slab = jnp.concatenate(
        [
            pad(w1, w1_rows),
            pad(w2, 128),
            pad(params["cw1"], 128),
            pad(params["cw2"], 128),
            pad(head_w, 128),
            bias_block,
        ],
        axis=0,
    )
    return slab


def absorp_gen_multitask_forward(x, slab, num_classes=3):
    B, input_dim = x.shape
    w1_rows = slab.shape[0] - 520

    # Batch tiling: one block at small B; auto-pipelined / megacore-sharded when large.
    TB = B if B <= 512 else 512
    grid = (pl.cdiv(B, TB),)

    kernel = functools.partial(_fused_kernel, input_dim=input_dim, w1_rows=w1_rows)

    out = pl.pallas_call(
        kernel,
        out_shape=jax.ShapeDtypeStruct((B, 128), jnp.float32),
        grid_spec=pltpu.PrefetchScalarGridSpec(
            num_scalar_prefetch=0,
            grid=grid,
            in_specs=[
                pl.BlockSpec((TB, input_dim), lambda i: (i, 0)),
                pl.BlockSpec((slab.shape[0], 128), lambda i: (0, 0)),  # weights stay resident
            ],
            out_specs=pl.BlockSpec((TB, 128), lambda i: (i, 0)),
        ),
        compiler_params=pltpu.CompilerParams(dimension_semantics=("parallel",)),
    )(x, slab)

    reg_out = out[:, :4]
    cls_out = out[:, 4:4 + num_classes]
    return reg_out, cls_out


def reference_forward(x, params):
    """Pure-JAX reference matching the PyTorch module semantics."""
    def lin(h, w, b):
        return h @ w + b
    p = jax.nn.relu(lin(x[:, :4], params["pw1"], params["pb1"]))
    p = jax.nn.relu(lin(p, params["pw2"], params["pb2"]))
    d = jax.nn.relu(lin(x[:, 4:], params["dw1"], params["db1"]))
    d = jax.nn.relu(lin(d, params["dw2"], params["db2"]))
    c = jnp.concatenate([p, d], axis=1)
    h = jax.nn.relu(lin(c, params["cw1"], params["cb1"]))
    s = jax.nn.relu(lin(h, params["cw2"], params["cb2"]))
    return lin(s, params["rw"], params["rb"]), lin(s, params["clw"], params["clb"])


if __name__ == "__main__":
    B = 8
    input_dim = 12        # 4 patient features + 8 drug features
    num_classes = 3

    key = jax.random.PRNGKey(0)
    kx, kp = jax.random.split(key)
    x = jax.random.normal(kx, (B, input_dim), dtype=jnp.float32)
    params = init_params(kp, input_dim, num_classes)
    slab = pack_params(params, input_dim, num_classes)

    reg_out, cls_out = absorp_gen_multitask_forward(x, slab, num_classes)
    jax.block_until_ready((reg_out, cls_out))

    reg_ref, cls_ref = reference_forward(x, params)
    assert reg_out.shape == (B, 4) and cls_out.shape == (B, num_classes)
    assert jnp.allclose(reg_out, reg_ref, atol=1e-5, rtol=1e-5)
    assert jnp.allclose(cls_out, cls_ref, atol=1e-5, rtol=1e-5)

    print("KERNEL_OK")
</pallas_src>

<mosaic_0001>
module attributes {stable_mosaic.version = 11 : i64} {
  func.func @_fused_kernel(%arg0: i32, %arg1: memref<8x12xf32, #tpu.memory_space<vmem>>, %arg2: memref<536x128xf32, #tpu.memory_space<vmem>>, %arg3: memref<8x128xf32, #tpu.memory_space<vmem>>) attributes {dimension_semantics = [#tpu.dimension_semantics<parallel>], iteration_bounds = array<i64: 1>, scalar_prefetch = 0 : i64, scratch_operands = 0 : i64, tpu.core_type = #tpu.core_type<tc>, window_params = [{transform_indices = @transform_0, window_bounds = array<i64: 8, 12>}, {pipeline_mode = #tpu.pipeline_mode<synchronous>, transform_indices = @transform_1, window_bounds = array<i64: 536, 128>}, {transform_indices = @transform_2, window_bounds = array<i64: 8, 128>}]} {
    %c0 = arith.constant 0 : index
    %c0_0 = arith.constant 0 : index
    %0 = vector.load %arg1[%c0, %c0_0] : memref<8x12xf32, #tpu.memory_space<vmem>>, vector<8x12xf32>
    %c528 = arith.constant 528 : index
    %c0_1 = arith.constant 0 : index
    %1 = vector.load %arg2[%c528, %c0_1] : memref<536x128xf32, #tpu.memory_space<vmem>>, vector<8x128xf32>
    %c0_2 = arith.constant 0 : index
    %c0_3 = arith.constant 0 : index
    %2 = vector.load %arg2[%c0_2, %c0_3] : memref<536x128xf32, #tpu.memory_space<vmem>>, vector<12x128xf32>
    %3 = vector.extract_strided_slice %1 {offsets = [0, 0], sizes = [1, 128], strides = [1, 1]} : vector<8x128xf32> to vector<1x128xf32>
    %cst = arith.constant dense<0.000000e+00> : vector<8x128xf32>
    %4 = tpu.matmul %0, %2, %cst {dimension_numbers = #tpu.dot_dimension_numbers<[1], [0], [0], [1], [0, 0, 1, 1], [], []>} : vector<8x12xf32>, vector<12x128xf32>, vector<8x128xf32> -> vector<8x128xf32>
    %5 = vector.broadcast %3 : vector<1x128xf32> to vector<8x128xf32>
    %6 = arith.addf %4, %5 : vector<8x128xf32>
    %cst_4 = arith.constant 0.000000e+00 : f32
    %7 = vector.broadcast %cst_4 : f32 to vector<8x128xf32>
    %8 = arith.maximumf %6, %7 : vector<8x128xf32>
    %c16 = arith.constant 16 : index
    %c0_5 = arith.constant 0 : index
    %9 = vector.load %arg2[%c16, %c0_5] : memref<536x128xf32, #tpu.memory_space<vmem>>, vector<128x128xf32>
    %10 = vector.extract_strided_slice %1 {offsets = [1, 0], sizes = [1, 128], strides = [1, 1]} : vector<8x128xf32> to vector<1x128xf32>
    %cst_6 = arith.constant dense<0.000000e+00> : vector<8x128xf32>
    %11 = tpu.matmul %8, %9, %cst_6 {dimension_numbers = #tpu.dot_dimension_numbers<[1], [0], [0], [1], [0, 0, 1, 1], [], []>} : vector<8x128xf32>, vector<128x128xf32>, vector<8x128xf32> -> vector<8x128xf32>
    %12 = vector.broadcast %10 : vector<1x128xf32> to vector<8x128xf32>
    %13 = arith.addf %11, %12 : vector<8x128xf32>
    %cst_7 = arith.constant 0.000000e+00 : f32
    %14 = vector.broadcast %cst_7 : f32 to vector<8x128xf32>
    %15 = arith.maximumf %13, %14 : vector<8x128xf32>
    %c144 = arith.constant 144 : index
    %c0_8 = arith.constant 0 : index
    %16 = vector.load %arg2[%c144, %c0_8] : memref<536x128xf32, #tpu.memory_space<vmem>>, vector<128x128xf32>
    %17 = vector.extract_strided_slice %1 {offsets = [2, 0], sizes = [1, 128], strides = [1, 1]} : vector<8x128xf32> to vector<1x128xf32>
    %cst_9 = arith.constant dense<0.000000e+00> : vector<8x128xf32>
    %18 = tpu.matmul %15, %16, %cst_9 {dimension_numbers = #tpu.dot_dimension_numbers<[1], [0], [0], [1], [0, 0, 1, 1], [], []>} : vector<8x128xf32>, vector<128x128xf32>, vector<8x128xf32> -> vector<8x128xf32>
    %19 = vector.broadcast %17 : vector<1x128xf32> to vector<8x128xf32>
    %20 = arith.addf %18, %19 : vector<8x128xf32>
    %cst_10 = arith.constant 0.000000e+00 : f32
    %21 = vector.broadcast %cst_10 : f32 to vector<8x128xf32>
    %22 = arith.maximumf %20, %21 : vector<8x128xf32>
    %c272 = arith.constant 272 : index
    %c0_11 = arith.constant 0 : index
    %23 = vector.load %arg2[%c272, %c0_11] : memref<536x128xf32, #tpu.memory_space<vmem>>, vector<128x128xf32>
    %24 = vector.extract_strided_slice %1 {offsets = [3, 0], sizes = [1, 128], strides = [1, 1]} : vector<8x128xf32> to vector<1x128xf32>
    %cst_12 = arith.constant dense<0.000000e+00> : vector<8x128xf32>
    %25 = tpu.matmul %22, %23, %cst_12 {dimension_numbers = #tpu.dot_dimension_numbers<[1], [0], [0], [1], [0, 0, 1, 1], [], []>} : vector<8x128xf32>, vector<128x128xf32>, vector<8x128xf32> -> vector<8x128xf32>
    %26 = vector.broadcast %24 : vector<1x128xf32> to vector<8x128xf32>
    %27 = arith.addf %25, %26 : vector<8x128xf32>
    %cst_13 = arith.constant 0.000000e+00 : f32
    %28 = vector.broadcast %cst_13 : f32 to vector<8x128xf32>
    %29 = arith.maximumf %27, %28 : vector<8x128xf32>
    %c400 = arith.constant 400 : index
    %c0_14 = arith.constant 0 : index
    %30 = vector.load %arg2[%c400, %c0_14] : memref<536x128xf32, #tpu.memory_space<vmem>>, vector<128x128xf32>
    %31 = vector.extract_strided_slice %1 {offsets = [4, 0], sizes = [1, 128], strides = [1, 1]} : vector<8x128xf32> to vector<1x128xf32>
    %cst_15 = arith.constant dense<0.000000e+00> : vector<8x128xf32>
    %32 = tpu.matmul %29, %30, %cst_15 {dimension_numbers = #tpu.dot_dimension_numbers<[1], [0], [0], [1], [0, 0, 1, 1], [], []>} : vector<8x128xf32>, vector<128x128xf32>, vector<8x128xf32> -> vector<8x128xf32>
    %33 = vector.broadcast %31 : vector<1x128xf32> to vector<8x128xf32>
    %34 = arith.addf %32, %33 : vector<8x128xf32>
    %c0_16 = arith.constant 0 : index
    %c0_17 = arith.constant 0 : index
    %35 = vector.load %arg3[%c0_16, %c0_17] : memref<8x128xf32, #tpu.memory_space<vmem>>, vector<8x128xf32>
    tpu.vector_store %arg3[%c0_16, %c0_17], %34 {strides = array<i32>} : memref<8x128xf32, #tpu.memory_space<vmem>>, vector<8x128xf32>,
    return
  }
  func.func @transform_0(%arg0: i32) -> (i32, i32) {
    %c0_i32 = arith.constant 0 : i32
    %c0_i32_0 = arith.constant 0 : i32
    return %arg0, %c0_i32 : i32, i32
  }
  func.func @transform_1(%arg0: i32) -> (i32, i32) {
    %c0_i32 = arith.constant 0 : i32
    %c0_i32_0 = arith.constant 0 : i32
    %c0_i32_1 = arith.constant 0 : i32
    return %c0_i32, %c0_i32_0 : i32, i32
  }
  func.func @transform_2(%arg0: i32) -> (i32, i32) {
    %c0_i32 = arith.constant 0 : i32
    %c0_i32_0 = arith.constant 0 : i32
    return %arg0, %c0_i32 : i32, i32
  }
}

</mosaic_0001>

<llo_original>
// kernel: tpu_custom_call.1
$region0: #{tpu_custom_call.1}
  #allocation0 [shape = 'u32[]', space=smem, size = 0x4, offset = 0x4, fixed_abs, tag = 'smem constant byte address 0x4 - core index']
  #allocation1 [shape = 'u32[144,128]{1,0:T(1,128)}', space=vmem, size = 0x12000, scoped, tag = 'internal scratch']
  %s0 = inlined_call_operand.hbm [shape: f32[8,12], index: 0, kind: input, shape index: {}]
  %s1 = inlined_call_operand.hbm [shape: f32[536,128], index: 1, kind: input, shape index: {}]
  %s2 = inlined_call_operand.hbm [shape: f32[8,128], index: 2, kind: output, shape index: {}]
  %s3 = sld [smem:[#allocation0]]
  $region26: #{tpu_custom_call.1} parent=0
    _
  %s5 = ssub.s32 1, %s3
  %s6 = scalar_select 0, %s5, %s3
  $region1: #{tpu_custom_call.1} parent=0
    #allocation2 [shape = 'u8[4096]{0}', space=vmem, size = 0x1000, scoped, tag = 'input window, operand 0, single buffered']
    #allocation3 [shape = 's32[1]{0}', space=sflag, size = 0x4, scoped, tag = 'scoped memory for tpu_custom_call.1']
    #allocation4 [shape = 's32[1]{0}', space=sflag, size = 0x4, scoped, tag = 'scoped memory for tpu_custom_call.1']
    #allocation5 [shape = 'u8[274432]{0}', space=vmem, size = 0x43000, scoped, tag = 'input window, operand 1, single buffered']
    #allocation6 [shape = 's32[1]{0}', space=sflag, size = 0x4, scoped, tag = 'scoped memory for tpu_custom_call.1']
    #allocation7 [shape = 'u8[4096]{0}', space=vmem, size = 0x1000, scoped, tag = 'output window, operand 0, single buffered']
    %7 = vsyncpa [#allocation3], 0
    %8 = vsyncpa [#allocation6], 0
    %9 = vsyncpa [#allocation4], 0
    // Predicated region
    $region2: #{tpu_custom_call.1} parent=1 // pred_check
      _
    $region3: #{tpu_custom_call.1} parent=1 // pred_check_branch
      %11 = sbr.rel (0) target = $region5
    $region4: #{tpu_custom_call.1} parent=1 // pred_region
      %s13 = ssub.s32 128, 128
      %14 = vsyncadd [#allocation3], %s13
      %s16 = sshll.u32 [#allocation2], 4
      %s17 = int_to_ptr.vmem [resolvable:$true] %s16
      %19 = dma.hbm_to_vmem [thread:$0]  %s0, 128, %s17, [#allocation3]
    $region5: #{tpu_custom_call.1} parent=1 // pred_fallthru
      _
    // Predicated region
    $region6: #{tpu_custom_call.1} parent=1 // pred_check
      _
    $region7: #{tpu_custom_call.1} parent=1 // pred_check_branch
      %21 = sbr.rel (0) target = $region9
    $region8: #{tpu_custom_call.1} parent=1 // pred_region
      %s23 = ssub.s32 8576, 8576
      %24 = vsyncadd [#allocation6], %s23
      %s25 = sshll.u32 [#allocation5], 4
      %s26 = int_to_ptr.vmem [resolvable:$true] %s25
      %31 = dma.hbm_to_vmem [thread:$0]  %s1, 8576, %s26, [#allocation6], 128, 128, 8
    $region9: #{tpu_custom_call.1} parent=1 // pred_fallthru
      _
    // Predicated region
    $region10: #{tpu_custom_call.1} parent=1 // pred_check
      _
    $region11: #{tpu_custom_call.1} parent=1 // pred_check_branch
      %33 = sbr.rel (0) target = $region13
    $region12: #{tpu_custom_call.1} parent=1 // pred_region
      %34 = dma.done [#allocation3], 128
    $region13: #{tpu_custom_call.1} parent=1 // pred_fallthru
      _
    // Predicated region
    $region14: #{tpu_custom_call.1} parent=1 // pred_check
      _
    $region15: #{tpu_custom_call.1} parent=1 // pred_check_branch
      %36 = sbr.rel (0) target = $region17
    $region16: #{tpu_custom_call.1} parent=1 // pred_region
      %37 = dma.done [#allocation6], 8576
    $region17: #{tpu_custom_call.1} parent=1 // pred_fallthru
      _
    %v38 = vld [vmem:[#allocation2] sm:$0xff]
    %v39 = vld [vmem:[#allocation5 + $0x210] sm:$0xff]
    %v40 = vld [vmem:[#allocation5] sm:$0xff]
    %v41 = vld [vmem:[#allocation5 + $0x8] sm:$0xf]
    %v42 = vlaneseq
    %v43 = vshrl.u32 %v42, 7
    %v44 = vsub.s32 0, %v43
    %v45 = vrot.slane %v39, %v44
    %vm46 = vcmask 97280
    %v48 = vsel %vm46, %v38, 0
    %vm50 = vcmask 1043456
    %v52 = vsel %vm50, %v41, 0
    %54 = vmatprep.subr.mxu0 0.0
    %55 = vmatpush1.msra.mxu0 %v40
    %56 = vmatprep.subr.mxu0 0.0
    %57 = vmatpush1.msra.mxu0 %v52
    %58 = vmatprep.subr.mxu0 0.0
    %59 = vmatpush1.msra.mxu0 0.0
    %60 = vmatprep.subr.mxu0 0.0
    %61 = vmatpush1.msra.mxu0 0.0
    %62 = vmatprep.subr.mxu0 0.0
    %63 = vmatpush1.msra.mxu0 0.0
    %64 = vmatprep.subr.mxu0 0.0
    %65 = vmatpush1.msra.mxu0 0.0
    %66 = vmatprep.subr.mxu0 0.0
    %67 = vmatpush1.msra.mxu0 0.0
    %68 = vmatprep.subr.mxu0 0.0
    %69 = vmatpush1.msra.mxu0 0.0
    %70 = vmatprep.subr.mxu0 0.0
    %71 = vmatpush1.msra.mxu0 0.0
    %72 = vmatprep.subr.mxu0 0.0
    %73 = vmatpush1.msra.mxu0 0.0
    %74 = vmatprep.subr.mxu0 0.0
    %75 = vmatpush1.msra.mxu0 0.0
    %76 = vmatprep.subr.mxu0 0.0
    %77 = vmatpush1.msra.mxu0 0.0
    %78 = vmatprep.subr.mxu0 0.0
    %79 = vmatpush1.msra.mxu0 0.0
    %80 = vmatprep.subr.mxu0 0.0
    %81 = vmatpush1.msra.mxu0 0.0
    %82 = vmatprep.subr.mxu0 0.0
    %83 = vmatpush1.msra.mxu0 0.0
    %84 = vmatprep.subr.mxu0 0.0
    %85 = vmatpush1.msra.mxu0 0.0
    %86 = vmatprep.subr.mxu0 0.0
    %87 = vmatpush1.msra.mxu0 0.0
    %88 = vmatprep.subr.mxu0 0.0
    %89 = vmatpush1.msra.mxu0 0.0
    %90 = vmatprep.subr.mxu0 0.0
    %91 = vmatpush1.msra.mxu0 0.0
    %92 = vmatprep.subr.mxu0 0.0
    %93 = vmatpush1.msra.mxu0 0.0
    %94 = vmatprep.subr.mxu0 0.0
    %95 = vmatpush1.msra.mxu0 0.0
    %96 = vmatprep.subr.mxu0 0.0
    %97 = vmatpush1.msra.mxu0 0.0
    %98 = vmatprep.subr.mxu0 0.0
    %99 = vmatpush1.msra.mxu0 0.0
    %100 = vmatprep.subr.mxu0 0.0
    %101 = vmatpush1.msra.mxu0 0.0
    %102 = vmatprep.subr.mxu0 0.0
    %103 = vmatpush1.msra.mxu0 0.0
    %104 = vmatprep.subr.mxu0 0.0
    %105 = vmatpush1.msra.mxu0 0.0
    %106 = vmatprep.subr.mxu0 0.0
    %107 = vmatpush1.msra.mxu0 0.0
    %108 = vmatprep.subr.mxu0 0.0
    %109 = vmatpush1.msra.mxu0 0.0
    %110 = vmatprep.subr.mxu0 0.0
    %111 = vmatpush1.msra.mxu0 0.0
    %112 = vmatprep.subr.mxu0 0.0
    %113 = vmatpush1.msra.mxu0 0.0
    %114 = vmatprep.subr.mxu0 0.0
    %115 = vmatpush1.msra.mxu0 0.0
    %116 = vmatprep.subr.mxu0 0.0
    %117 = vmatpush1.msra.mxu0 0.0
    %118 = vmatprep.mubr.f32.mxu0 0.0
    %119 = vmatmul.mubr.f32.gmra.mrb[0].mxu0 %v48
    %v120 = vpop.f32.mrb[0].mxu0
    %v121 = vadd.f32 %v45, %v120
    %v122 = vpop.f32.mrb[0].mxu0
    %123 = vdwg.mxu0
    %v124 = vmax.f32 %v121, 0.0
    %v125 = vld [vmem:[#allocation5 + $0x10] sm:$0xff]
    %v126 = vld [vmem:[#allocation5 + $0x18] sm:$0xff]
    %v127 = vld [vmem:[#allocation5 + $0x20] sm:$0xff]
    %v128 = vld [vmem:[#allocation5 + $0x28] sm:$0xff]
    %v129 = vld [vmem:[#allocation5 + $0x30] sm:$0xff]
    %v130 = vld [vmem:[#allocation5 + $0x38] sm:$0xff]
    %v131 = vld [vmem:[#allocation5 + $0x40] sm:$0xff]
    %v132 = vld [vmem:[#allocation5 + $0x48] sm:$0xff]
    %v133 = vld [vmem:[#allocation5 + $0x50] sm:$0xff]
    %v134 = vld [vmem:[#allocation5 + $0x58] sm:$0xff]
    %v135 = vld [vmem:[#allocation5 + $0x60] sm:$0xff]
    %v136 = vld [vmem:[#allocation5 + $0x68] sm:$0xff]
    %v137 = vld [vmem:[#allocation5 + $0x70] sm:$0xff]
    %v138 = vld [vmem:[#allocation5 + $0x78] sm:$0xff]
    %v139 = vld [vmem:[#allocation5 + $0x80] sm:$0xff]
    %v140 = vld [vmem:[#allocation5 + $0x88] sm:$0xff]
    %v141 = vlaneseq
    %v142 = vshrl.u32 %v141, 7
    %v143 = vsub.s32 1, %v142
    %v144 = vrot.slane %v39, %v143
    %145 = vmatprep.subr.mxu0 0.0
    %146 = vmatpush1.msra.mxu0 %v125
    %147 = vmatprep.subr.mxu0 0.0
    %148 = vmatpush1.msra.mxu0 %v126
    %149 = vmatprep.subr.mxu0 0.0
    %150 = vmatpush1.msra.mxu0 %v127
    %151 = vmatprep.subr.mxu0 0.0
    %152 = vmatpush1.msra.mxu0 %v128
    %153 = vmatprep.subr.mxu0 0.0
    %154 = vmatpush1.msra.mxu0 %v129
    %155 = vmatprep.subr.mxu0 0.0
    %156 = vmatpush1.msra.mxu0 %v130
    %157 = vmatprep.subr.mxu0 0.0
    %158 = vmatpush1.msra.mxu0 %v131
    %159 = vmatprep.subr.mxu0 0.0
    %160 = vmatpush1.msra.mxu0 %v132
    %161 = vmatprep.subr.mxu0 0.0
    %162 = vmatpush1.msra.mxu0 %v133
    %163 = vmatprep.subr.mxu0 0.0
    %164 = vmatpush1.msra.mxu0 %v134
    %165 = vmatprep.subr.mxu0 0.0
    %166 = vmatpush1.msra.mxu0 %v135
    %167 = vmatprep.subr.mxu0 0.0
    %168 = vmatpush1.msra.mxu0 %v136
    %169 = vmatprep.subr.mxu0 0.0
    %170 = vmatpush1.msra.mxu0 %v137
    %171 = vmatprep.subr.mxu0 0.0
    %172 = vmatpush1.msra.mxu0 %v138
    %173 = vmatprep.subr.mxu0 0.0
    %174 = vmatpush1.msra.mxu0 %v139
    %175 = vmatprep.subr.mxu0 0.0
    %176 = vmatpush1.msra.mxu0 %v140
    %177 = vmatprep.subr.mxu0 0.0
    %178 = vmatpush1.msra.mxu0 0.0
    %179 = vmatprep.subr.mxu0 0.0
    %180 = vmatpush1.msra.mxu0 0.0
    %181 = vmatprep.subr.mxu0 0.0
    %182 = vmatpush1.msra.mxu0 0.0
    %183 = vmatprep.subr.mxu0 0.0
    %184 = vmatpush1.msra.mxu0 0.0
    %185 = vmatprep.subr.mxu0 0.0
    %186 = vmatpush1.msra.mxu0 0.0
    %187 = vmatprep.subr.mxu0 0.0
    %188 = vmatpush1.msra.mxu0 0.0
    %189 = vmatprep.subr.mxu0 0.0
    %190 = vmatpush1.msra.mxu0 0.0
    %191 = vmatprep.subr.mxu0 0.0
    %192 = vmatpush1.msra.mxu0 0.0
    %193 = vmatprep.subr.mxu0 0.0
    %194 = vmatpush1.msra.mxu0 0.0
    %195 = vmatprep.subr.mxu0 0.0
    %196 = vmatpush1.msra.mxu0 0.0
    %197 = vmatprep.subr.mxu0 0.0
    %198 = vmatpush1.msra.mxu0 0.0
    %199 = vmatprep.subr.mxu0 0.0
    %200 = vmatpush1.msra.mxu0 0.0
    %201 = vmatprep.subr.mxu0 0.0
    %202 = vmatpush1.msra.mxu0 0.0
    %203 = vmatprep.subr.mxu0 0.0
    %204 = vmatpush1.msra.mxu0 0.0
    %205 = vmatprep.subr.mxu0 0.0
    %206 = vmatpush1.msra.mxu0 0.0
    %207 = vmatprep.subr.mxu0 0.0
    %208 = vmatpush1.msra.mxu0 0.0
    %209 = vmatprep.mubr.f32.mxu0 0.0
    %210 = vmatmul.mubr.f32.gmra.mrb[0].mxu0 %v124
    %v211 = vpop.f32.mrb[0].mxu0
    %v212 = vadd.f32 %v144, %v211
    %v213 = vpop.f32.mrb[0].mxu0
    %214 = vdwg.mxu0
    %v215 = vmax.f32 %v212, 0.0
    %v216 = vld [vmem:[#allocation5 + $0x90] sm:$0xff]
    %v217 = vld [vmem:[#allocation5 + $0x98] sm:$0xff]
    %v218 = vld [vmem:[#allocation5 + $0xa0] sm:$0xff]
    %v219 = vld [vmem:[#allocation5 + $0xa8] sm:$0xff]
    %v220 = vld [vmem:[#allocation5 + $0xb0] sm:$0xff]
    %v221 = vld [vmem:[#allocation5 + $0xb8] sm:$0xff]
    %v222 = vld [vmem:[#allocation5 + $0xc0] sm:$0xff]
    %v223 = vld [vmem:[#allocation5 + $0xc8] sm:$0xff]
    %v224 = vld [vmem:[#allocation5 + $0xd0] sm:$0xff]
    %v225 = vld [vmem:[#allocation5 + $0xd8] sm:$0xff]
    %v226 = vld [vmem:[#allocation5 + $0xe0] sm:$0xff]
    %v227 = vld [vmem:[#allocation5 + $0xe8] sm:$0xff]
    %v228 = vld [vmem:[#allocation5 + $0xf0] sm:$0xff]
    %v229 = vld [vmem:[#allocation5 + $0xf8] sm:$0xff]
    %v230 = vld [vmem:[#allocation5 + $0x100] sm:$0xff]
    %v231 = vld [vmem:[#allocation5 + $0x108] sm:$0xff]
    %v232 = vlaneseq
    %v233 = vshrl.u32 %v232, 7
    %v234 = vsub.s32 2, %v233
    %v235 = vrot.slane %v39, %v234
    %236 = vmatprep.subr.mxu0 0.0
    %237 = vmatpush1.msra.mxu0 %v216
    %238 = vmatprep.subr.mxu0 0.0
    %239 = vmatpush1.msra.mxu0 %v217
    %240 = vmatprep.subr.mxu0 0.0
    %241 = vmatpush1.msra.mxu0 %v218
    %242 = vmatprep.subr.mxu0 0.0
    %243 = vmatpush1.msra.mxu0 %v219
    %244 = vmatprep.subr.mxu0 0.0
    %245 = vmatpush1.msra.mxu0 %v220
    %246 = vmatprep.subr.mxu0 0.0
    %247 = vmatpush1.msra.mxu0 %v221
    %248 = vmatprep.subr.mxu0 0.0
    %249 = vmatpush1.msra.mxu0 %v222
    %250 = vmatprep.subr.mxu0 0.0
    %251 = vmatpush1.msra.mxu0 %v223
    %252 = vmatprep.subr.mxu0 0.0
    %253 = vmatpush1.msra.mxu0 %v224
    %254 = vmatprep.subr.mxu0 0.0
    %255 = vmatpush1.msra.mxu0 %v225
    %256 = vmatprep.subr.mxu0 0.0
    %257 = vmatpush1.msra.mxu0 %v226
    %258 = vmatprep.subr.mxu0 0.0
    %259 = vmatpush1.msra.mxu0 %v227
    %260 = vmatprep.subr.mxu0 0.0
    %261 = vmatpush1.msra.mxu0 %v228
    %262 = vmatprep.subr.mxu0 0.0
    %263 = vmatpush1.msra.mxu0 %v229
    %264 = vmatprep.subr.mxu0 0.0
    %265 = vmatpush1.msra.mxu0 %v230
    %266 = vmatprep.subr.mxu0 0.0
    %267 = vmatpush1.msra.mxu0 %v231
    %268 = vmatprep.subr.mxu0 0.0
    %269 = vmatpush1.msra.mxu0 0.0
    %270 = vmatprep.subr.mxu0 0.0
    %271 = vmatpush1.msra.mxu0 0.0
    %272 = vmatprep.subr.mxu0 0.0
    %273 = vmatpush1.msra.mxu0 0.0
    %274 = vmatprep.subr.mxu0 0.0
    %275 = vmatpush1.msra.mxu0 0.0
    %276 = vmatprep.subr.mxu0 0.0
    %277 = vmatpush1.msra.mxu0 0.0
    %278 = vmatprep.subr.mxu0 0.0
    %279 = vmatpush1.msra.mxu0 0.0
    %280 = vmatprep.subr.mxu0 0.0
    %281 = vmatpush1.msra.mxu0 0.0
    %282 = vmatprep.subr.mxu0 0.0
    %283 = vmatpush1.msra.mxu0 0.0
    %284 = vmatprep.subr.mxu0 0.0
    %285 = vmatpush1.msra.mxu0 0.0
    %286 = vmatprep.subr.mxu0 0.0
    %287 = vmatpush1.msra.mxu0 0.0
    %288 = vmatprep.subr.mxu0 0.0
    %289 = vmatpush1.msra.mxu0 0.0
    %290 = vmatprep.subr.mxu0 0.0
    %291 = vmatpush1.msra.mxu0 0.0
    %292 = vmatprep.subr.mxu0 0.0
    %293 = vmatpush1.msra.mxu0 0.0
    %294 = vmatprep.subr.mxu0 0.0
    %295 = vmatpush1.msra.mxu0 0.0
    %296 = vmatprep.subr.mxu0 0.0
    %297 = vmatpush1.msra.mxu0 0.0
    %298 = vmatprep.subr.mxu0 0.0
    %299 = vmatpush1.msra.mxu0 0.0
    %300 = vmatprep.mubr.f32.mxu0 0.0
    %301 = vmatmul.mubr.f32.gmra.mrb[0].mxu0 %v215
    %v302 = vpop.f32.mrb[0].mxu0
    %v303 = vadd.f32 %v235, %v302
    %v304 = vpop.f32.mrb[0].mxu0
    %305 = vdwg.mxu0
    %v306 = vmax.f32 %v303, 0.0
    %v307 = vld [vmem:[#allocation5 + $0x110] sm:$0xff]
    %v308 = vld [vmem:[#allocation5 + $0x118] sm:$0xff]
    %v309 = vld [vmem:[#allocation5 + $0x120] sm:$0xff]
    %v310 = vld [vmem:[#allocation5 + $0x128] sm:$0xff]
    %v311 = vld [vmem:[#allocation5 + $0x130] sm:$0xff]
    %v312 = vld [vmem:[#allocation5 + $0x138] sm:$0xff]
    %v313 = vld [vmem:[#allocation5 + $0x140] sm:$0xff]
    %v314 = vld [vmem:[#allocation5 + $0x148] sm:$0xff]
    %v315 = vld [vmem:[#allocation5 + $0x150] sm:$0xff]
    %v316 = vld [vmem:[#allocation5 + $0x158] sm:$0xff]
    %v317 = vld [vmem:[#allocation5 + $0x160] sm:$0xff]
    %v318 = vld [vmem:[#allocation5 + $0x168] sm:$0xff]
    %v319 = vld [vmem:[#allocation5 + $0x170] sm:$0xff]
    %v320 = vld [vmem:[#allocation5 + $0x178] sm:$0xff]
    %v321 = vld [vmem:[#allocation5 + $0x180] sm:$0xff]
    %v322 = vld [vmem:[#allocation5 + $0x188] sm:$0xff]
    %v323 = vlaneseq
    %v324 = vshrl.u32 %v323, 7
    %v325 = vsub.s32 3, %v324
    %v326 = vrot.slane %v39, %v325
    %327 = vmatprep.subr.mxu0 0.0
    %328 = vmatpush1.msra.mxu0 %v307
    %329 = vmatprep.subr.mxu0 0.0
    %330 = vmatpush1.msra.mxu0 %v308
    %331 = vmatprep.subr.mxu0 0.0
    %332 = vmatpush1.msra.mxu0 %v309
    %333 = vmatprep.subr.mxu0 0.0
    %334 = vmatpush1.msra.mxu0 %v310
    %335 = vmatprep.subr.mxu0 0.0
    %336 = vmatpush1.msra.mxu0 %v311
    %337 = vmatprep.subr.mxu0 0.0
    %338 = vmatpush1.msra.mxu0 %v312
    %339 = vmatprep.subr.mxu0 0.0
    %340 = vmatpush1.msra.mxu0 %v313
    %341 = vmatprep.subr.mxu0 0.0
    %342 = vmatpush1.msra.mxu0 %v314
    %343 = vmatprep.subr.mxu0 0.0
    %344 = vmatpush1.msra.mxu0 %v315
    %345 = vmatprep.subr.mxu0 0.0
    %346 = vmatpush1.msra.mxu0 %v316
    %347 = vmatprep.subr.mxu0 0.0
    %348 = vmatpush1.msra.mxu0 %v317
    %349 = vmatprep.subr.mxu0 0.0
    %350 = vmatpush1.msra.mxu0 %v318
    %351 = vmatprep.subr.mxu0 0.0
    %352 = vmatpush1.msra.mxu0 %v319
    %353 = vmatprep.subr.mxu0 0.0
    %354 = vmatpush1.msra.mxu0 %v320
    %355 = vmatprep.subr.mxu0 0.0
    %356 = vmatpush1.msra.mxu0 %v321
    %357 = vmatprep.subr.mxu0 0.0
    %358 = vmatpush1.msra.mxu0 %v322
    %359 = vmatprep.subr.mxu0 0.0
    %360 = vmatpush1.msra.mxu0 0.0
    %361 = vmatprep.subr.mxu0 0.0
    %362 = vmatpush1.msra.mxu0 0.0
    %363 = vmatprep.subr.mxu0 0.0
    %364 = vmatpush1.msra.mxu0 0.0
    %365 = vmatprep.subr.mxu0 0.0
    %366 = vmatpush1.msra.mxu0 0.0
    %367 = vmatprep.subr.mxu0 0.0
    %368 = vmatpush1.msra.mxu0 0.0
    %369 = vmatprep.subr.mxu0 0.0
    %370 = vmatpush1.msra.mxu0 0.0
    %371 = vmatprep.subr.mxu0 0.0
    %372 = vmatpush1.msra.mxu0 0.0
    %373 = vmatprep.subr.mxu0 0.0
    %374 = vmatpush1.msra.mxu0 0.0
    %375 = vmatprep.subr.mxu0 0.0
    %376 = vmatpush1.msra.mxu0 0.0
    %377 = vmatprep.subr.mxu0 0.0
    %378 = vmatpush1.msra.mxu0 0.0
    %379 = vmatprep.subr.mxu0 0.0
    %380 = vmatpush1.msra.mxu0 0.0
    %381 = vmatprep.subr.mxu0 0.0
    %382 = vmatpush1.msra.mxu0 0.0
    %383 = vmatprep.subr.mxu0 0.0
    %384 = vmatpush1.msra.mxu0 0.0
    %385 = vmatprep.subr.mxu0 0.0
    %386 = vmatpush1.msra.mxu0 0.0
    %387 = vmatprep.subr.mxu0 0.0
    %388 = vmatpush1.msra.mxu0 0.0
    %389 = vmatprep.subr.mxu0 0.0
    %390 = vmatpush1.msra.mxu0 0.0
    %391 = vmatprep.mubr.f32.mxu0 0.0
    %392 = vmatmul.mubr.f32.gmra.mrb[0].mxu0 %v306
    %v393 = vpop.f32.mrb[0].mxu0
    %v394 = vadd.f32 %v326, %v393
    %v395 = vpop.f32.mrb[0].mxu0
    %396 = vdwg.mxu0
    %v397 = vmax.f32 %v394, 0.0
    %v398 = vld [vmem:[#allocation5 + $0x190] sm:$0xff]
    %v399 = vld [vmem:[#allocation5 + $0x198] sm:$0xff]
    %v400 = vld [vmem:[#allocation5 + $0x1a0] sm:$0xff]
    %v401 = vld [vmem:[#allocation5 + $0x1a8] sm:$0xff]
    %v402 = vld [vmem:[#allocation5 + $0x1b0] sm:$0xff]
    %v403 = vld [vmem:[#allocation5 + $0x1b8] sm:$0xff]
    %v404 = vld [vmem:[#allocation5 + $0x1c0] sm:$0xff]
    %v405 = vld [vmem:[#allocation5 + $0x1c8] sm:$0xff]
    %v406 = vld [vmem:[#allocation5 + $0x1d0] sm:$0xff]
    %v407 = vld [vmem:[#allocation5 + $0x1d8] sm:$0xff]
    %v408 = vld [vmem:[#allocation5 + $0x1e0] sm:$0xff]
    %v409 = vld [vmem:[#allocation5 + $0x1e8] sm:$0xff]
    %v410 = vld [vmem:[#allocation5 + $0x1f0] sm:$0xff]
    %v411 = vld [vmem:[#allocation5 + $0x1f8] sm:$0xff]
    %v412 = vld [vmem:[#allocation5 + $0x200] sm:$0xff]
    %v413 = vld [vmem:[#allocation5 + $0x208] sm:$0xff]
    %v414 = vlaneseq
    %v415 = vshrl.u32 %v414, 7
    %v416 = vsub.s32 4, %v415
    %v417 = vrot.slane %v39, %v416
    %418 = vmatprep.subr.mxu0 0.0
    %419 = vmatpush1.msra.mxu0 %v398
    %420 = vmatprep.subr.mxu0 0.0
    %421 = vmatpush1.msra.mxu0 %v399
    %422 = vmatprep.subr.mxu0 0.0
    %423 = vmatpush1.msra.mxu0 %v400
    %424 = vmatprep.subr.mxu0 0.0
    %425 = vmatpush1.msra.mxu0 %v401
    %426 = vmatprep.subr.mxu0 0.0
    %427 = vmatpush1.msra.mxu0 %v402
    %428 = vmatprep.subr.mxu0 0.0
    %429 = vmatpush1.msra.mxu0 %v403
    %430 = vmatprep.subr.mxu0 0.0
    %431 = vmatpush1.msra.mxu0 %v404
    %432 = vmatprep.subr.mxu0 0.0
    %433 = vmatpush1.msra.mxu0 %v405
    %434 = vmatprep.subr.mxu0 0.0
    %435 = vmatpush1.msra.mxu0 %v406
    %436 = vmatprep.subr.mxu0 0.0
    %437 = vmatpush1.msra.mxu0 %v407
    %438 = vmatprep.subr.mxu0 0.0
    %439 = vmatpush1.msra.mxu0 %v408
    %440 = vmatprep.subr.mxu0 0.0
    %441 = vmatpush1.msra.mxu0 %v409
    %442 = vmatprep.subr.mxu0 0.0
    %443 = vmatpush1.msra.mxu0 %v410
    %444 = vmatprep.subr.mxu0 0.0
    %445 = vmatpush1.msra.mxu0 %v411
    %446 = vmatprep.subr.mxu0 0.0
    %447 = vmatpush1.msra.mxu0 %v412
    %448 = vmatprep.subr.mxu0 0.0
    %449 = vmatpush1.msra.mxu0 %v413
    %450 = vmatprep.subr.mxu0 0.0
    %451 = vmatpush1.msra.mxu0 0.0
    %452 = vmatprep.subr.mxu0 0.0
    %453 = vmatpush1.msra.mxu0 0.0
    %454 = vmatprep.subr.mxu0 0.0
    %455 = vmatpush1.msra.mxu0 0.0
    %456 = vmatprep.subr.mxu0 0.0
    %457 = vmatpush1.msra.mxu0 0.0
    %458 = vmatprep.subr.mxu0 0.0
    %459 = vmatpush1.msra.mxu0 0.0
    %460 = vmatprep.subr.mxu0 0.0
    %461 = vmatpush1.msra.mxu0 0.0
    %462 = vmatprep.subr.mxu0 0.0
    %463 = vmatpush1.msra.mxu0 0.0
    %464 = vmatprep.subr.mxu0 0.0
    %465 = vmatpush1.msra.mxu0 0.0
    %466 = vmatprep.subr.mxu0 0.0
    %467 = vmatpush1.msra.mxu0 0.0
    %468 = vmatprep.subr.mxu0 0.0
    %469 = vmatpush1.msra.mxu0 0.0
    %470 = vmatprep.subr.mxu0 0.0
    %471 = vmatpush1.msra.mxu0 0.0
    %472 = vmatprep.subr.mxu0 0.0
    %473 = vmatpush1.msra.mxu0 0.0
    %474 = vmatprep.subr.mxu0 0.0
    %475 = vmatpush1.msra.mxu0 0.0
    %476 = vmatprep.subr.mxu0 0.0
    %477 = vmatpush1.msra.mxu0 0.0
    %478 = vmatprep.subr.mxu0 0.0
    %479 = vmatpush1.msra.mxu0 0.0
    %480 = vmatprep.subr.mxu0 0.0
    %481 = vmatpush1.msra.mxu0 0.0
    %482 = vmatprep.mubr.f32.mxu0 0.0
    %483 = vmatmul.mubr.f32.gmra.mrb[0].mxu0 %v397
    %v484 = vpop.f32.mrb[0].mxu0
    %v485 = vadd.f32 %v417, %v484
    %v486 = vpop.f32.mrb[0].mxu0
    %487 = vdwg.mxu0
    %488 = vst [vmem:[#allocation7] sm:$0xff] %v485
    // Predicated region
    $region18: #{tpu_custom_call.1} parent=1 // pred_check
      _
    $region19: #{tpu_custom_call.1} parent=1 // pred_check_branch
      %490 = sbr.rel (0) target = $region21
    $region20: #{tpu_custom_call.1} parent=1 // pred_region
      %s492 = ssub.s32 128, 128
      %493 = vsyncadd [#allocation4], %s492
      %s495 = sshll.u32 [#allocation7], 4
      %s496 = int_to_ptr.vmem [resolvable:$true] %s495
      %498 = dma.vmem_to_hbm [thread:$0]  %s496, 128, %s2, [#allocation4]
    $region21: #{tpu_custom_call.1} parent=1 // pred_fallthru
      _
    // Predicated region
    $region22: #{tpu_custom_call.1} parent=1 // pred_check
      _
    $region23: #{tpu_custom_call.1} parent=1 // pred_check_branch
      %500 = sbr.rel (0) target = $region25
    $region24: #{tpu_custom_call.1} parent=1 // pred_region
      %501 = dma.done [#allocation4], 128
    $region25: #{tpu_custom_call.1} parent=1 // pred_fallthru
      _
    %502 = vsyncpa [#allocation3], 1
    %503 = vsyncpa [#allocation6], 1
    %504 = vsyncpa [#allocation4], 1

</llo_original>
